<compile_context>
chip_gen: v7x
topology: tpu7x:2x2x1
jax: 0.10.0
libtpu: 0.0.40
codegen_flags: <defaults>
</compile_context>

<pallas_src>
import jax
import jax.numpy as jnp
from jax.experimental import pallas as pl
from jax.experimental.pallas import tpu as pltpu

# -------- small, module-consistent shapes --------
NB, NS, C, H, W = 2, 8, 4, 16, 16        # nb samples, ns slices, c x h x w per slice
HW = H * W
NBLOCK = 1
FVDIM = 512 // 2 ** (4 - NBLOCK)         # = 64  (matches fvdim formula for feat='resnet')
K = 10                                    # classifier width
KPAD = 128                                # lane-dense padded classifier width

# rows of the packed "smalls" (8, 128) tile
ROW_WEXT0 = 0                             # rows 0..C-1 : wext (C, FVDIM)
ROW_BEXT = C                              # row C       : bext (FVDIM)
ROW_Q0 = C + 1                            # row C+1     : q0   (FVDIM)
ROW_BP = C + 2                            # row C+2     : bp   (K, padded to 128)


def naggn_kernel(nslice_ref,              # SMEM (NB,) int32   (scalar prefetch)
                 x_ref,                   # (NB*NS, C, HW) bf16
                 wp_ref,                  # (FVDIM, KPAD) f32  (K padded to 128)
                 smalls_ref,              # (8, KPAD) f32      (wext / bext / q0 / bp packed)
                 o_ref):                  # (NB, KPAD) f32
    # ---- unpack small params (static slices of one VMEM tile) ----
    wext = smalls_ref[ROW_WEXT0:ROW_WEXT0 + C, 0:FVDIM]          # (C, FVDIM)
    bext = smalls_ref[ROW_BEXT:ROW_BEXT + 1, 0:FVDIM]            # (1, FVDIM)
    q0 = smalls_ref[ROW_Q0:ROW_Q0 + 1, 0:FVDIM]                  # (1, FVDIM)
    bp = smalls_ref[ROW_BP:ROW_BP + 1, :]                        # (1, KPAD)

    # ---- feature extraction for all NB*NS slices at once ----
    # TODO(synk): extractor.Resnet is an external module (not provided); substituted with a
    # deterministic global-average-pool + linear + ReLU feature extractor.
    x = x_ref[...].astype(jnp.float32)                           # (NB*NS, C, HW), f32 math
    pooled = jnp.mean(x, axis=-1)                                # (NB*NS, C)   XLU lane reduce
    fvs2 = jnp.maximum(
        jnp.dot(pooled, wext, preferred_element_type=jnp.float32) + bext,
        0.0)                                                     # (NB*NS, FVDIM) one MXU matmul
    fvs = fvs2.reshape(NB, NS, FVDIM)                            # lane dim unchanged -> free-ish

    # ---- L1 aggregator (batched over samples), VPU + XLU only ----
    # ek[b, n] = q0 . fvs[b, n]
    ek = jnp.sum(fvs * q0.reshape(1, 1, FVDIM), axis=-1, keepdims=True)     # (NB, NS, 1)

    # mask so only the first nslice[b] slices participate (matches x[s, :nslice[s]])
    idx = jax.lax.broadcasted_iota(jnp.int32, (NB, NS, 1), 1)
    batch_idx = jax.lax.broadcasted_iota(jnp.int32, (NB, NS, 1), 0)
    n_valid = jnp.zeros((NB, NS, 1), jnp.int32)
    for b in range(NB):                                          # static, NB tiny
        # NOTE: nslice==0 is clamped to 1 (attends to slice 0) to avoid an all-masked -inf softmax;
        # the reference semantics for an empty sample are undefined/NaN.
        nb_valid = jnp.maximum(nslice_ref[b], 1)
        n_valid = jnp.where(batch_idx == b, nb_valid, n_valid)
    ek = jnp.where(idx < n_valid, ek, -jnp.inf)

    ek_max = jnp.max(ek, axis=1, keepdims=True)                  # (NB, 1, 1)
    p = jnp.exp(ek - ek_max)                                     # exactly 0 on masked rows (EUP)
    ak = p / jnp.sum(p, axis=1, keepdims=True)                   # exact divide (accuracy, same cost)

    # r0[b, f] = sum_n ak[b, n] * fvs[b, n, f]   (VPU mul + XLU sublane reduce)
    r0 = jnp.sum(ak * fvs, axis=1)                               # (NB, FVDIM)

    # ---- projection + sigmoid; K padded to 128 lanes -> unmasked lane-dense store ----
    logits = jnp.dot(r0, wp_ref[...], preferred_element_type=jnp.float32) + bp   # (NB, KPAD)
    o_ref[...] = jax.nn.sigmoid(logits)


def prepare_params(params):
    """One-time parameter packing/padding (hoisted out of the per-call forward path)."""
    wext, bext, q0, wp, bp = params
    smalls = jnp.zeros((8, KPAD), jnp.float32)
    smalls = smalls.at[ROW_WEXT0:ROW_WEXT0 + C, 0:FVDIM].set(wext)
    smalls = smalls.at[ROW_BEXT, 0:FVDIM].set(bext[0])
    smalls = smalls.at[ROW_Q0, 0:FVDIM].set(q0[0])
    smalls = smalls.at[ROW_BP, 0:K].set(bp[0])
    wp_pad = jnp.zeros((FVDIM, KPAD), jnp.float32).at[:, :K].set(wp)
    return wp_pad, smalls


@jax.jit
def naggn_forward(x, nslice, prepared):
    wp_pad, smalls = prepared

    # layout plumbing: free reshape + bf16 storage cast for the dominant input
    x_k = x.reshape(NB * NS, C, HW).astype(jnp.bfloat16)         # (16, 4, 256)
    nsl = nslice.astype(jnp.int32).reshape(NB)

    out = pl.pallas_call(
        naggn_kernel,
        out_shape=jax.ShapeDtypeStruct((NB, KPAD), jnp.float32),
        grid_spec=pltpu.PrefetchScalarGridSpec(
            num_scalar_prefetch=1,                               # nslice -> SMEM
            grid=(1,),                                           # whole problem is VMEM-resident
            in_specs=[
                pl.BlockSpec((NB * NS, C, HW), lambda i, ns: (0, 0, 0)),   # x (bf16)
                pl.BlockSpec((FVDIM, KPAD),    lambda i, ns: (0, 0)),      # wp (padded head)
                pl.BlockSpec((8, KPAD),        lambda i, ns: (0, 0)),      # packed smalls
            ],
            out_specs=pl.BlockSpec((NB, KPAD), lambda i, ns: (0, 0)),
        ),
        compiler_params=pltpu.CompilerParams(dimension_semantics=("arbitrary",)),
    )(nsl, x_k, wp_pad, smalls)

    return out[:, :K]                                            # (NB, K)


def ref_forward(x, nslice, params):
    """Pure-JAX reference mirroring the PyTorch forward semantics (per-sample loop)."""
    wext, bext, q0, wp, bp = params
    outs = []
    for s in range(NB):
        xs = x[s, : int(nslice[s])]                     # (nslice[s], C, H, W)
        pooled = jnp.mean(xs, axis=(2, 3))              # (nslice[s], C)
        fvs = jnp.maximum(pooled @ wext + bext, 0.0)    # (nslice[s], FVDIM)
        ek = q0 @ fvs.T                                 # (1, nslice[s])
        ak = jax.nn.softmax(ek, axis=1)
        r0 = ak @ fvs                                   # (1, FVDIM)
        outs.append(jax.nn.sigmoid(r0 @ wp + bp))       # (1, K)
    return jnp.concatenate(outs, axis=0)                # (NB, K)


if __name__ == "__main__":
    key = jax.random.PRNGKey(0)
    k1, k2, k3, k4 = jax.random.split(key, 4)

    # deterministic synthetic parameters (shapes implied by the module __init__)
    wext = jax.random.normal(k1, (C, FVDIM), jnp.float32) * 0.1            # extractor linear
    bext = jnp.zeros((1, FVDIM), jnp.float32)
    q0 = jnp.ones((1, FVDIM), jnp.float32)                                  # L1Aggregator.q0 = ones
    wp = jax.random.normal(k2, (FVDIM, K), jnp.float32) / jnp.sqrt(FVDIM)   # proj weight (transposed)
    bp = jax.random.normal(k3, (1, K), jnp.float32) * 0.01                  # proj bias
    params = (wext, bext, q0, wp, bp)

    prepared = prepare_params(params)    # one-time packing (not part of the per-call forward)

    x = jax.random.normal(k4, (NB, NS, C, H, W), jnp.float32)
    nslice = jnp.array([NS, 5], dtype=jnp.int32)   # variable valid-slice counts per sample

    out = jax.block_until_ready(naggn_forward(x, nslice, prepared))
    ref = ref_forward(x, nslice, params)

    assert out.shape == (NB, K)
    # tolerance accounts for the bf16 storage cast of x (all in-kernel math is f32)
    assert jnp.allclose(out, ref, atol=2e-3, rtol=2e-3), (out, ref)

    print("KERNEL_OK")
</pallas_src>

<mosaic_0001>
module attributes {stable_mosaic.version = 11 : i64} {
  func.func @naggn_kernel(%arg0: i32, %arg1: memref<2xi32, #tpu.memory_space<smem>>, %arg2: memref<16x4x256xbf16, #tpu.memory_space<vmem>>, %arg3: memref<64x128xf32, #tpu.memory_space<vmem>>, %arg4: memref<8x128xf32, #tpu.memory_space<vmem>>, %arg5: memref<2x128xf32, #tpu.memory_space<vmem>>) attributes {dimension_semantics = [#tpu.dimension_semantics<arbitrary>], iteration_bounds = array<i64: 1>, scalar_prefetch = 1 : i64, scratch_operands = 0 : i64, tpu.core_type = #tpu.core_type<tc>, window_params = [{pipeline_mode = #tpu.pipeline_mode<synchronous>, transform_indices = @transform_0, window_bounds = array<i64: 16, 4, 256>}, {pipeline_mode = #tpu.pipeline_mode<synchronous>, transform_indices = @transform_1, window_bounds = array<i64: 64, 128>}, {pipeline_mode = #tpu.pipeline_mode<synchronous>, transform_indices = @transform_2, window_bounds = array<i64: 8, 128>}, {pipeline_mode = #tpu.pipeline_mode<synchronous>, transform_indices = @transform_3, window_bounds = array<i64: 2, 128>}]} {
    %c0 = arith.constant 0 : index
    %c0_0 = arith.constant 0 : index
    %0 = vector.load %arg4[%c0, %c0_0] : memref<8x128xf32, #tpu.memory_space<vmem>>, vector<4x64xf32>
    %c4 = arith.constant 4 : index
    %c0_1 = arith.constant 0 : index
    %1 = vector.load %arg4[%c4, %c0_1] : memref<8x128xf32, #tpu.memory_space<vmem>>, vector<1x64xf32>
    %c5 = arith.constant 5 : index
    %c0_2 = arith.constant 0 : index
    %2 = vector.load %arg4[%c5, %c0_2] : memref<8x128xf32, #tpu.memory_space<vmem>>, vector<1x64xf32>
    %c6 = arith.constant 6 : index
    %c0_3 = arith.constant 0 : index
    %3 = vector.load %arg4[%c6, %c0_3] : memref<8x128xf32, #tpu.memory_space<vmem>>, vector<1x128xf32>
    %c0_4 = arith.constant 0 : index
    %c0_5 = arith.constant 0 : index
    %c0_6 = arith.constant 0 : index
    %4 = vector.load %arg2[%c0_4, %c0_5, %c0_6] : memref<16x4x256xbf16, #tpu.memory_space<vmem>>, vector<16x4x256xbf16>
    %5 = arith.extf %4 : vector<16x4x256xbf16> to vector<16x4x256xf32>
    %cst = arith.constant dense<0.000000e+00> : vector<16x4xf32>
    %6 = vector.multi_reduction <add>, %5, %cst [2] : vector<16x4x256xf32> to vector<16x4xf32>
    %cst_7 = arith.constant 2.560000e+02 : f32
    %7 = vector.broadcast %cst_7 : f32 to vector<16x4xf32>
    %8 = arith.divf %6, %7 : vector<16x4xf32>
    %cst_8 = arith.constant dense<0.000000e+00> : vector<16x64xf32>
    %9 = tpu.matmul %8, %0, %cst_8 {dimension_numbers = #tpu.dot_dimension_numbers<[1], [0], [0], [1], [0, 0, 1, 1], [], []>} : vector<16x4xf32>, vector<4x64xf32>, vector<16x64xf32> -> vector<16x64xf32>
    %10 = vector.broadcast %1 : vector<1x64xf32> to vector<16x64xf32>
    %11 = arith.addf %9, %10 : vector<16x64xf32>
    %cst_9 = arith.constant 0.000000e+00 : f32
    %12 = vector.broadcast %cst_9 : f32 to vector<16x64xf32>
    %13 = arith.maximumf %11, %12 : vector<16x64xf32>
    %14 = vector.shape_cast %13 : vector<16x64xf32> to vector<2x8x64xf32>
    %15 = vector.shape_cast %2 : vector<1x64xf32> to vector<1x1x64xf32>
    %16 = vector.broadcast %15 : vector<1x1x64xf32> to vector<2x8x64xf32>
    %17 = arith.mulf %14, %16 : vector<2x8x64xf32>
    %cst_10 = arith.constant dense<0.000000e+00> : vector<2x8xf32>
    %18 = vector.multi_reduction <add>, %17, %cst_10 [2] : vector<2x8x64xf32> to vector<2x8xf32>
    %19 = vector.shape_cast %18 : vector<2x8xf32> to vector<2x8x1xf32>
    %20 = tpu.iota {dimensions = array<i32: 1>} : vector<2x8x1xi32>
    %21 = tpu.iota {dimensions = array<i32: 0>} : vector<2x8x1xi32>
    %c0_i32 = arith.constant 0 : i32
    %22 = vector.broadcast %c0_i32 : i32 to vector<2x8x1xi32>
    %c0_11 = arith.constant 0 : index
    %23 = memref.load %arg1[%c0_11] : memref<2xi32, #tpu.memory_space<smem>>
    %c1_i32 = arith.constant 1 : i32
    %24 = arith.maxsi %23, %c1_i32 : i32
    %c0_i32_12 = arith.constant 0 : i32
    %25 = vector.broadcast %c0_i32_12 : i32 to vector<2x8x1xi32>
    %26 = arith.cmpi eq, %21, %25 : vector<2x8x1xi32>
    %27 = vector.broadcast %24 : i32 to vector<2x8x1xi32>
    %28 = arith.select %26, %27, %22 : vector<2x8x1xi1>, vector<2x8x1xi32>
    %c1 = arith.constant 1 : index
    %29 = memref.load %arg1[%c1] : memref<2xi32, #tpu.memory_space<smem>>
    %c1_i32_13 = arith.constant 1 : i32
    %30 = arith.maxsi %29, %c1_i32_13 : i32
    %c1_i32_14 = arith.constant 1 : i32
    %31 = vector.broadcast %c1_i32_14 : i32 to vector<2x8x1xi32>
    %32 = arith.cmpi eq, %21, %31 : vector<2x8x1xi32>
    %33 = vector.broadcast %30 : i32 to vector<2x8x1xi32>
    %34 = arith.select %32, %33, %28 : vector<2x8x1xi1>, vector<2x8x1xi32>
    %35 = arith.cmpi slt, %20, %34 : vector<2x8x1xi32>
    %cst_15 = arith.constant 0xFF800000 : f32
    %36 = vector.broadcast %cst_15 : f32 to vector<2x8x1xf32>
    %37 = arith.select %35, %19, %36 : vector<2x8x1xi1>, vector<2x8x1xf32>
    %cst_16 = arith.constant dense<0xFF800000> : vector<2x1xf32>
    %38 = vector.multi_reduction <maximumf>, %37, %cst_16 [1] : vector<2x8x1xf32> to vector<2x1xf32>
    %39 = vector.shape_cast %38 : vector<2x1xf32> to vector<2x1x1xf32>
    %40 = vector.broadcast %39 : vector<2x1x1xf32> to vector<2x8x1xf32>
    %41 = arith.subf %37, %40 : vector<2x8x1xf32>
    %42 = math.exp %41 : vector<2x8x1xf32>
    %cst_17 = arith.constant dense<0.000000e+00> : vector<2x1xf32>
    %43 = vector.multi_reduction <add>, %42, %cst_17 [1] : vector<2x8x1xf32> to vector<2x1xf32>
    %44 = vector.shape_cast %43 : vector<2x1xf32> to vector<2x1x1xf32>
    %45 = vector.broadcast %44 : vector<2x1x1xf32> to vector<2x8x1xf32>
    %46 = arith.divf %42, %45 : vector<2x8x1xf32>
    %47 = vector.broadcast %46 : vector<2x8x1xf32> to vector<2x8x64xf32>
    %48 = arith.mulf %47, %14 : vector<2x8x64xf32>
    %cst_18 = arith.constant dense<0.000000e+00> : vector<2x64xf32>
    %49 = vector.multi_reduction <add>, %48, %cst_18 [1] : vector<2x8x64xf32> to vector<2x64xf32>
    %c0_19 = arith.constant 0 : index
    %c0_20 = arith.constant 0 : index
    %50 = vector.load %arg3[%c0_19, %c0_20] : memref<64x128xf32, #tpu.memory_space<vmem>>, vector<64x128xf32>
    %cst_21 = arith.constant dense<0.000000e+00> : vector<2x128xf32>
    %51 = tpu.matmul %49, %50, %cst_21 {dimension_numbers = #tpu.dot_dimension_numbers<[1], [0], [0], [1], [0, 0, 1, 1], [], []>} : vector<2x64xf32>, vector<64x128xf32>, vector<2x128xf32> -> vector<2x128xf32>
    %52 = vector.broadcast %3 : vector<1x128xf32> to vector<2x128xf32>
    %53 = arith.addf %51, %52 : vector<2x128xf32>
    %54 = arith.negf %53 : vector<2x128xf32>
    %55 = math.exp %54 : vector<2x128xf32>
    %cst_22 = arith.constant 1.000000e+00 : f32
    %56 = vector.broadcast %cst_22 : f32 to vector<2x128xf32>
    %57 = arith.addf %56, %55 : vector<2x128xf32>
    %58 = arith.divf %56, %57 : vector<2x128xf32>
    %c0_23 = arith.constant 0 : index
    %c0_24 = arith.constant 0 : index
    %59 = vector.load %arg5[%c0_23, %c0_24] : memref<2x128xf32, #tpu.memory_space<vmem>>, vector<2x128xf32>
    tpu.vector_store %arg5[%c0_23, %c0_24], %58 {strides = array<i32>} : memref<2x128xf32, #tpu.memory_space<vmem>>, vector<2x128xf32>,
    return
  }
  func.func @transform_0(%arg0: i32, %arg1: memref<2xi32, #tpu.memory_space<smem>>) -> (i32, i32, i32) {
    %c0_i32 = arith.constant 0 : i32
    %c0_i32_0 = arith.constant 0 : i32
    %c0_i32_1 = arith.constant 0 : i32
    %c0_i32_2 = arith.constant 0 : i32
    return %c0_i32, %c0_i32_0, %c0_i32_1 : i32, i32, i32
  }
  func.func @transform_1(%arg0: i32, %arg1: memref<2xi32, #tpu.memory_space<smem>>) -> (i32, i32) {
    %c0_i32 = arith.constant 0 : i32
    %c0_i32_0 = arith.constant 0 : i32
    %c0_i32_1 = arith.constant 0 : i32
    return %c0_i32, %c0_i32_0 : i32, i32
  }
  func.func @transform_2(%arg0: i32, %arg1: memref<2xi32, #tpu.memory_space<smem>>) -> (i32, i32) {
    %c0_i32 = arith.constant 0 : i32
    %c0_i32_0 = arith.constant 0 : i32
    %c0_i32_1 = arith.constant 0 : i32
    return %c0_i32, %c0_i32_0 : i32, i32
  }
  func.func @transform_3(%arg0: i32, %arg1: memref<2xi32, #tpu.memory_space<smem>>) -> (i32, i32) {
    %c0_i32 = arith.constant 0 : i32
    %c0_i32_0 = arith.constant 0 : i32
    %c0_i32_1 = arith.constant 0 : i32
    return %c0_i32, %c0_i32_0 : i32, i32
  }
}

</mosaic_0001>

<llo_original>
// kernel: naggn_forward.1
$region0: #{naggn_forward.1}
  #allocation0 [shape = 'u32[]', space=smem, size = 0x4, offset = 0x4, fixed_abs, tag = 'smem constant byte address 0x4 - core index']
  #allocation1 [shape = 'u32[144,128]{1,0:T(1,128)}', space=vmem, size = 0x12000, scoped, tag = 'internal scratch']
  #allocation2 [shape = 's32[1]{0}', space=sflag, size = 0x4, scoped, tag = 'scoped memory for naggn_forward.1']
  #allocation3 [shape = 'u8[512]{0}', space=smem, size = 0x200, scoped, tag = 'prefetched SMEM operand 0']
  %s0 = inlined_call_operand.vmem [shape: s32[2], index: 0, kind: input, shape index: {}]
  %s1 = inlined_call_operand.vmem [shape: bf16[16,4,256], index: 1, kind: input, shape index: {}]
  %s2 = inlined_call_operand.vmem [shape: f32[64,128], index: 2, kind: input, shape index: {}]
  %s3 = inlined_call_operand.vmem [shape: f32[8,128], index: 3, kind: input, shape index: {}]
  %s4 = inlined_call_operand.hbm [shape: f32[2,128], index: 4, kind: output, shape index: {}]
  %s5 = sld [smem:[#allocation0]]
  $region22: #{naggn_forward.1} parent=0
    _
  %s7 = ssub.s32 1, %s5
  %s8 = scalar_select 0, %s7, %s5
  %s9 = sshll.u32 %s0, 4
  %s10 = int_to_ptr.vmem [resolvable:$true] %s9
  %12 = dma.vmem_to_smem %s10, 16, [#allocation3], [#allocation2]
  %13 = dma.done [#allocation2], 16
  %14 = sfence
  $region1: #{naggn_forward.1} parent=0
    #allocation4 [shape = 'u8[1024]{0}', space=vmem, size = 0x400, scoped, tag = 'output window, operand 0, single buffered']
    #allocation5 [shape = 's32[1]{0}', space=sflag, size = 0x4, scoped, tag = 'scoped memory for naggn_forward.1']
    %15 = vsyncpa [#allocation5], 0
    // Predicated region
    $region2: #{naggn_forward.1} parent=1 // pred_check
      _
    $region3: #{naggn_forward.1} parent=1 // pred_check_branch
      %17 = sbr.rel (0) target = $region5
    $region4: #{naggn_forward.1} parent=1 // pred_region
      _
    $region5: #{naggn_forward.1} parent=1 // pred_fallthru
      _
    // Predicated region
    $region6: #{naggn_forward.1} parent=1 // pred_check
      _
    $region7: #{naggn_forward.1} parent=1 // pred_check_branch
      %19 = sbr.rel (0) target = $region9
    $region8: #{naggn_forward.1} parent=1 // pred_region
      _
    $region9: #{naggn_forward.1} parent=1 // pred_fallthru
      _
    // Predicated region
    $region10: #{naggn_forward.1} parent=1 // pred_check
      _
    $region11: #{naggn_forward.1} parent=1 // pred_check_branch
      %21 = sbr.rel (0) target = $region13
    $region12: #{naggn_forward.1} parent=1 // pred_region
      _
    $region13: #{naggn_forward.1} parent=1 // pred_fallthru
      _
    %v22 = vld [vmem:[%s3] sm:$0xf]
    %v23 = vld [vmem:[%s3 + $0x4] sm:$0x1]
    %v24 = vld [vmem:[%s3 + $0x5] sm:$0x1]
    %v25 = vld [vmem:[%s3 + $0x6] sm:$0x1]
    %v26 = vld [vmem:[%s1] sm:$0xf]
    %v27 = vld [vmem:[%s1 + $0x4] sm:$0xf]
    %v28 = vld [vmem:[%s1 + $0x8] sm:$0xf]
    %v29 = vld [vmem:[%s1 + $0xc] sm:$0xf]
    %v30 = vld [vmem:[%s1 + $0x10] sm:$0xf]
    %v31 = vld [vmem:[%s1 + $0x14] sm:$0xf]
    %v32 = vld [vmem:[%s1 + $0x18] sm:$0xf]
    %v33 = vld [vmem:[%s1 + $0x1c] sm:$0xf]
    %v34 = vld [vmem:[%s1 + $0x20] sm:$0xf]
    %v35 = vld [vmem:[%s1 + $0x24] sm:$0xf]
    %v36 = vld [vmem:[%s1 + $0x28] sm:$0xf]
    %v37 = vld [vmem:[%s1 + $0x2c] sm:$0xf]
    %v38 = vld [vmem:[%s1 + $0x30] sm:$0xf]
    %v39 = vld [vmem:[%s1 + $0x34] sm:$0xf]
    %v40 = vld [vmem:[%s1 + $0x38] sm:$0xf]
    %v41 = vld [vmem:[%s1 + $0x3c] sm:$0xf]
    %v42 = vunpack.c.l.bf16 %v26
    %v43 = vunpack.c.l.bf16 %v27
    %v44 = vunpack.c.l.bf16 %v28
    %v45 = vunpack.c.l.bf16 %v29
    %v46 = vunpack.c.l.bf16 %v30
    %v47 = vunpack.c.l.bf16 %v31
    %v48 = vunpack.c.l.bf16 %v32
    %v49 = vunpack.c.l.bf16 %v33
    %v50 = vunpack.c.l.bf16 %v34
    %v51 = vunpack.c.l.bf16 %v35
    %v52 = vunpack.c.l.bf16 %v36
    %v53 = vunpack.c.l.bf16 %v37
    %v54 = vunpack.c.l.bf16 %v38
    %v55 = vunpack.c.l.bf16 %v39
    %v56 = vunpack.c.l.bf16 %v40
    %v57 = vunpack.c.l.bf16 %v41
    %v74 = vcombine.high %v42, %v42
    %v75 = vcombine.high %v43, %v43
    %v76 = vcombine.high %v44, %v44
    %v77 = vcombine.high %v45, %v45
    %v78 = vcombine.high %v46, %v46
    %v79 = vcombine.high %v47, %v47
    %v80 = vcombine.high %v48, %v48
    %v81 = vcombine.high %v49, %v49
    %v82 = vcombine.high %v50, %v50
    %v83 = vcombine.high %v51, %v51
    %v84 = vcombine.high %v52, %v52
    %v85 = vcombine.high %v53, %v53
    %v86 = vcombine.high %v54, %v54
    %v87 = vcombine.high %v55, %v55
    %v88 = vcombine.high %v56, %v56
    %v89 = vcombine.high %v57, %v57
    %vm106 = vcmask 1043456
    %v107 = vsel %vm106, %v42, 0.0
    %v108 = vsel %vm106, %v74, 0.0
    %v109 = vadd.f32 %v107, %v108
    %110 = vadd.xlane.f32.xlu0 %v109
    %v111 = vpop.xlane.xlu0 %110
    %v112 = vsel %vm106, %v43, 0.0
    %v113 = vsel %vm106, %v75, 0.0
    %v114 = vadd.f32 %v112, %v113
    %115 = vadd.xlane.f32.xlu0 %v114
    %v116 = vpop.xlane.xlu0 %115
    %v117 = vsel %vm106, %v44, 0.0
    %v118 = vsel %vm106, %v76, 0.0
    %v119 = vadd.f32 %v117, %v118
    %120 = vadd.xlane.f32.xlu0 %v119
    %v121 = vpop.xlane.xlu0 %120
    %v122 = vsel %vm106, %v45, 0.0
    %v123 = vsel %vm106, %v77, 0.0
    %v124 = vadd.f32 %v122, %v123
    %125 = vadd.xlane.f32.xlu0 %v124
    %v126 = vpop.xlane.xlu0 %125
    %v127 = vsel %vm106, %v46, 0.0
    %v128 = vsel %vm106, %v78, 0.0
    %v129 = vadd.f32 %v127, %v128
    %130 = vadd.xlane.f32.xlu0 %v129
    %v131 = vpop.xlane.xlu0 %130
    %v132 = vsel %vm106, %v47, 0.0
    %v133 = vsel %vm106, %v79, 0.0
    %v134 = vadd.f32 %v132, %v133
    %135 = vadd.xlane.f32.xlu0 %v134
    %v136 = vpop.xlane.xlu0 %135
    %v137 = vsel %vm106, %v48, 0.0
    %v138 = vsel %vm106, %v80, 0.0
    %v139 = vadd.f32 %v137, %v138
    %140 = vadd.xlane.f32.xlu0 %v139
    %v141 = vpop.xlane.xlu0 %140
    %v142 = vsel %vm106, %v49, 0.0
    %v143 = vsel %vm106, %v81, 0.0
    %v144 = vadd.f32 %v142, %v143
    %145 = vadd.xlane.f32.xlu0 %v144
    %v146 = vpop.xlane.xlu0 %145
    %v147 = vsel %vm106, %v50, 0.0
    %v148 = vsel %vm106, %v82, 0.0
    %v149 = vadd.f32 %v147, %v148
    %150 = vadd.xlane.f32.xlu0 %v149
    %v151 = vpop.xlane.xlu0 %150
    %v152 = vsel %vm106, %v51, 0.0
    %v153 = vsel %vm106, %v83, 0.0
    %v154 = vadd.f32 %v152, %v153
    %155 = vadd.xlane.f32.xlu0 %v154
    %v156 = vpop.xlane.xlu0 %155
    %v157 = vsel %vm106, %v52, 0.0
    %v158 = vsel %vm106, %v84, 0.0
    %v159 = vadd.f32 %v157, %v158
    %160 = vadd.xlane.f32.xlu0 %v159
    %v161 = vpop.xlane.xlu0 %160
    %v162 = vsel %vm106, %v53, 0.0
    %v163 = vsel %vm106, %v85, 0.0
    %v164 = vadd.f32 %v162, %v163
    %165 = vadd.xlane.f32.xlu0 %v164
    %v166 = vpop.xlane.xlu0 %165
    %v167 = vsel %vm106, %v54, 0.0
    %v168 = vsel %vm106, %v86, 0.0
    %v169 = vadd.f32 %v167, %v168
    %170 = vadd.xlane.f32.xlu0 %v169
    %v171 = vpop.xlane.xlu0 %170
    %v172 = vsel %vm106, %v55, 0.0
    %v173 = vsel %vm106, %v87, 0.0
    %v174 = vadd.f32 %v172, %v173
    %175 = vadd.xlane.f32.xlu0 %v174
    %v176 = vpop.xlane.xlu0 %175
    %v177 = vsel %vm106, %v56, 0.0
    %v178 = vsel %vm106, %v88, 0.0
    %v179 = vadd.f32 %v177, %v178
    %180 = vadd.xlane.f32.xlu0 %v179
    %v181 = vpop.xlane.xlu0 %180
    %v182 = vsel %vm106, %v57, 0.0
    %v183 = vsel %vm106, %v89, 0.0
    %v184 = vadd.f32 %v182, %v183
    %185 = vadd.xlane.f32.xlu0 %v184
    %v186 = vpop.xlane.xlu0 %185
    %v187 = vrcp.pop 256.0
    %v188 = vmul.f32 %v111, %v187
    %v189 = vmul.f32 %v116, %v187
    %v190 = vmul.f32 %v121, %v187
    %v191 = vmul.f32 %v126, %v187
    %v192 = vmul.f32 %v131, %v187
    %v193 = vmul.f32 %v136, %v187
    %v194 = vmul.f32 %v141, %v187
    %v195 = vmul.f32 %v146, %v187
    %v196 = vmul.f32 %v151, %v187
    %v197 = vmul.f32 %v156, %v187
    %v198 = vmul.f32 %v161, %v187
    %v199 = vmul.f32 %v166, %v187
    %v200 = vmul.f32 %v171, %v187
    %v201 = vmul.f32 %v176, %v187
    %v202 = vmul.f32 %v181, %v187
    %v203 = vmul.f32 %v186, %v187
    %v204 = vlaneseq
    %v205 = vshrl.u32 %v204, 7
    %v206 = vsub.s32 0, %v205
    %v207 = vrot.slane %v23, %v206
    %v224 = vlaneseq
    %v225 = vand.u32 %v224, 127
    %v226 = vlaneseq
    %v227 = vshrl.u32 %v226, 7
    %v228 = vsub.s32 %v225, %v227
    %v229 = vrot.slane %v188, %v228
    %v230 = vlaneseq
    %v231 = vshrl.u32 %v230, 7
    %v232 = vsub.s32 %v225, %v231
    %v233 = vrot.slane %v189, %v232
    %v234 = vlaneseq
    %v235 = vshrl.u32 %v234, 7
    %v236 = vsub.s32 %v225, %v235
    %v237 = vrot.slane %v190, %v236
    %v238 = vlaneseq
    %v239 = vshrl.u32 %v238, 7
    %v240 = vsub.s32 %v225, %v239
    %v241 = vrot.slane %v191, %v240
    %v242 = vlaneseq
    %v243 = vshrl.u32 %v242, 7
    %v244 = vsub.s32 %v225, %v243
    %v245 = vrot.slane %v192, %v244
    %v246 = vlaneseq
    %v247 = vshrl.u32 %v246, 7
    %v248 = vsub.s32 %v225, %v247
    %v249 = vrot.slane %v193, %v248
    %v250 = vlaneseq
    %v251 = vshrl.u32 %v250, 7
    %v252 = vsub.s32 %v225, %v251
    %v253 = vrot.slane %v194, %v252
    %v254 = vlaneseq
    %v255 = vshrl.u32 %v254, 7
    %v256 = vsub.s32 %v225, %v255
    %v257 = vrot.slane %v195, %v256
    %v258 = vlaneseq
    %v259 = vshrl.u32 %v258, 7
    %v260 = vsub.s32 %v225, %v259
    %v261 = vrot.slane %v196, %v260
    %v262 = vlaneseq
    %v263 = vshrl.u32 %v262, 7
    %v264 = vsub.s32 %v225, %v263
    %v265 = vrot.slane %v197, %v264
    %v266 = vlaneseq
    %v267 = vshrl.u32 %v266, 7
    %v268 = vsub.s32 %v225, %v267
    %v269 = vrot.slane %v198, %v268
    %v270 = vlaneseq
    %v271 = vshrl.u32 %v270, 7
    %v272 = vsub.s32 %v225, %v271
    %v273 = vrot.slane %v199, %v272
    %v274 = vlaneseq
    %v275 = vshrl.u32 %v274, 7
    %v276 = vsub.s32 %v225, %v275
    %v277 = vrot.slane %v200, %v276
    %v278 = vlaneseq
    %v279 = vshrl.u32 %v278, 7
    %v280 = vsub.s32 %v225, %v279
    %v281 = vrot.slane %v201, %v280
    %v282 = vlaneseq
    %v283 = vshrl.u32 %v282, 7
    %v284 = vsub.s32 %v225, %v283
    %v285 = vrot.slane %v202, %v284
    %v286 = vlaneseq
    %v287 = vshrl.u32 %v286, 7
    %v288 = vsub.s32 %v225, %v287
    %v289 = vrot.slane %v203, %v288
    %vm290 = vcmask 1041409
    %v291 = vsel %vm290, %v233, %v229
    %vm292 = vcmask 1042434
    %v293 = vsel %vm292, %v237, %v291
    %vm294 = vcmask 1043459
    %v295 = vsel %vm294, %v241, %v293
    %vm296 = vcmask 1044484
    %v297 = vsel %vm296, %v245, %v295
    %vm298 = vcmask 1045509
    %v299 = vsel %vm298, %v249, %v297
    %vm300 = vcmask 1046534
    %v301 = vsel %vm300, %v253, %v299
    %vm302 = vcmask 1047559
    %v303 = vsel %vm302, %v257, %v301
    %v304 = vsel %vm290, %v265, %v261
    %v305 = vsel %vm292, %v269, %v304
    %v306 = vsel %vm294, %v273, %v305
    %v307 = vsel %vm296, %v277, %v306
    %v308 = vsel %vm298, %v281, %v307
    %v309 = vsel %vm300, %v285, %v308
    %v310 = vsel %vm302, %v289, %v309
    %vm311 = vcmask 31744
    %v312 = vsel %vm311, %v303, 0
    %v314 = vsel %vm311, %v310, 0
    %v317 = vsel %vm106, %v22, 0
    %319 = vmatprep.subr.mxu0 0.0
    %320 = vmatpush1.msra.mxu0 %v317
    %321 = vmatprep.subr.mxu0 0.0
    %322 = vmatpush1.msra.mxu0 0.0
    %323 = vmatprep.subr.mxu0 0.0
    %324 = vmatpush1.msra.mxu0 0.0
    %325 = vmatprep.subr.mxu0 0.0
    %326 = vmatpush1.msra.mxu0 0.0
    %327 = vmatprep.subr.mxu0 0.0
    %328 = vmatpush1.msra.mxu0 0.0
    %329 = vmatprep.subr.mxu0 0.0
    %330 = vmatpush1.msra.mxu0 0.0
    %331 = vmatprep.subr.mxu0 0.0
    %332 = vmatpush1.msra.mxu0 0.0
    %333 = vmatprep.subr.mxu0 0.0
    %334 = vmatpush1.msra.mxu0 0.0
    %335 = vmatprep.subr.mxu0 0.0
    %336 = vmatpush1.msra.mxu0 0.0
    %337 = vmatprep.subr.mxu0 0.0
    %338 = vmatpush1.msra.mxu0 0.0
    %339 = vmatprep.subr.mxu0 0.0
    %340 = vmatpush1.msra.mxu0 0.0
    %341 = vmatprep.subr.mxu0 0.0
    %342 = vmatpush1.msra.mxu0 0.0
    %343 = vmatprep.subr.mxu0 0.0
    %344 = vmatpush1.msra.mxu0 0.0
    %345 = vmatprep.subr.mxu0 0.0
    %346 = vmatpush1.msra.mxu0 0.0
    %347 = vmatprep.subr.mxu0 0.0
    %348 = vmatpush1.msra.mxu0 0.0
    %349 = vmatprep.subr.mxu0 0.0
    %350 = vmatpush1.msra.mxu0 0.0
    %351 = vmatprep.subr.mxu0 0.0
    %352 = vmatpush1.msra.mxu0 0.0
    %353 = vmatprep.subr.mxu0 0.0
    %354 = vmatpush1.msra.mxu0 0.0
    %355 = vmatprep.subr.mxu0 0.0
    %356 = vmatpush1.msra.mxu0 0.0
    %357 = vmatprep.subr.mxu0 0.0
    %358 = vmatpush1.msra.mxu0 0.0
    %359 = vmatprep.subr.mxu0 0.0
    %360 = vmatpush1.msra.mxu0 0.0
    %361 = vmatprep.subr.mxu0 0.0
    %362 = vmatpush1.msra.mxu0 0.0
    %363 = vmatprep.subr.mxu0 0.0
    %364 = vmatpush1.msra.mxu0 0.0
    %365 = vmatprep.subr.mxu0 0.0
    %366 = vmatpush1.msra.mxu0 0.0
    %367 = vmatprep.subr.mxu0 0.0
    %368 = vmatpush1.msra.mxu0 0.0
    %369 = vmatprep.subr.mxu0 0.0
    %370 = vmatpush1.msra.mxu0 0.0
    %371 = vmatprep.subr.mxu0 0.0
    %372 = vmatpush1.msra.mxu0 0.0
    %373 = vmatprep.subr.mxu0 0.0
    %374 = vmatpush1.msra.mxu0 0.0
    %375 = vmatprep.subr.mxu0 0.0
    %376 = vmatpush1.msra.mxu0 0.0
    %377 = vmatprep.subr.mxu0 0.0
    %378 = vmatpush1.msra.mxu0 0.0
    %379 = vmatprep.subr.mxu0 0.0
    %380 = vmatpush1.msra.mxu0 0.0
    %381 = vmatprep.subr.mxu0 0.0
    %382 = vmatpush1.msra.mxu0 0.0
    %383 = vmatprep.mubr.f32.mxu0 0.0
    %384 = vmatmul.mubr.f32.gmra.mrb[0].mxu0 %v312
    %v385 = vpop.f32.mrb[0].mxu0
    %v386 = vadd.f32 %v207, %v385
    %v387 = vpop.f32.mrb[0].mxu0
    %388 = vmatprep.mubr.f32.mxu0 0.0
    %389 = vmatmul.mubr.f32.gmra.mrb[0].mxu0 %v314
    %v390 = vpop.f32.mrb[0].mxu0
    %v391 = vadd.f32 %v207, %v390
    %v392 = vpop.f32.mrb[0].mxu0
    %393 = vdwg.mxu0
    %v394 = vmax.f32 %v386, 0.0
    %v395 = vmax.f32 %v391, 0.0
    %v396 = vlaneseq
    %v397 = vshrl.u32 %v396, 7
    %v398 = vsub.s32 0, %v397
    %v399 = vrot.slane %v24, %v398
    %v400 = vmul.f32 %v394, %v399
    %v401 = vmul.f32 %v395, %v399
    %vm402 = vcmask 523264
    %v403 = vsel %vm402, %v400, 0.0
    %404 = vadd.xlane.f32.xlu0 %v403
    %v405 = vpop.xlane.xlu0 %404
    %v406 = vsel %vm402, %v401, 0.0
    %407 = vadd.xlane.f32.xlu0 %v406
    %v408 = vpop.xlane.xlu0 %407
    %v409 = vlaneseq
    %v410 = vshrl.u32 %v409, 7
    %s411 = sld [smem:[#allocation3]]
    %p412 = scmp.gt.s32.totalorder %s411, 1
    %s413 = scalar_select %p412, %s411, 1
    %v414 = vstv %s413
    %s415 = sld [smem:[#allocation3 + $0x1]]
    %p416 = scmp.gt.s32.totalorder %s415, 1
    %s417 = scalar_select %p416, %s415, 1
    %v418 = vstv %s417
    %vm419 = vcmp.lt.s32.totalorder %v410, %v414
    %vm420 = vcmp.lt.s32.totalorder %v410, %v418
    %v421 = vsel %vm419, %v405, -inf
    %v422 = vsel %vm420, %v408, -inf
    %v423 = vrot.slane %v421, 4
    %v424 = vmax.f32 %v421, %v423
    %v425 = vrot.slane %v424, 2
    %v426 = vmax.f32 %v424, %v425
    %v427 = vrot.slane %v426, 1
    %v428 = vmax.f32 %v426, %v427
    %v429 = vrot.slane %v422, 4
    %v430 = vmax.f32 %v422, %v429
    %v431 = vrot.slane %v430, 2
    %v432 = vmax.f32 %v430, %v431
    %v433 = vrot.slane %v432, 1
    %v434 = vmax.f32 %v432, %v433
    %v435 = vsub.f32 %v421, %v428
    %v436 = vsub.f32 %v422, %v434
    %v437 = vmul.f32 %v435, 1.442695
    %v438 = vpow.pop %v437
    %v439 = vmul.f32 %v436, 1.442695
    %v440 = vpow.pop %v439
    %v441 = vrot.slane %v438, 4
    %v442 = vadd.f32 %v438, %v441
    %v443 = vrot.slane %v442, 2
    %v444 = vadd.f32 %v442, %v443
    %v445 = vrot.slane %v444, 1
    %v446 = vadd.f32 %v444, %v445
    %v447 = vrot.slane %v440, 4
    %v448 = vadd.f32 %v440, %v447
    %v449 = vrot.slane %v448, 2
    %v450 = vadd.f32 %v448, %v449
    %v451 = vrot.slane %v450, 1
    %v452 = vadd.f32 %v450, %v451
    %v453 = vrcp.pop %v446
    %v454 = vmul.f32 %v438, %v453
    %v455 = vrcp.pop %v452
    %v456 = vmul.f32 %v440, %v455
    %v457 = vmul.f32 %v454, %v394
    %v458 = vmul.f32 %v456, %v395
    %v459 = vsel %vm402, %v457, 0.0
    %v460 = vrot.slane %v459, 4
    %v461 = vadd.f32 %v459, %v460
    %v462 = vrot.slane %v461, 2
    %v463 = vadd.f32 %v461, %v462
    %v464 = vrot.slane %v463, 1
    %v465 = vadd.f32 %v463, %v464
    %v466 = vsel %vm402, %v458, 0.0
    %v467 = vrot.slane %v466, 4
    %v468 = vadd.f32 %v466, %v467
    %v469 = vrot.slane %v468, 2
    %v470 = vadd.f32 %v468, %v469
    %v471 = vrot.slane %v470, 1
    %v472 = vadd.f32 %v470, %v471
    %v473 = vld [vmem:[%s2] sm:$0xff]
    %v474 = vld [vmem:[%s2 + $0x8] sm:$0xff]
    %v475 = vld [vmem:[%s2 + $0x10] sm:$0xff]
    %v476 = vld [vmem:[%s2 + $0x18] sm:$0xff]
    %v477 = vld [vmem:[%s2 + $0x20] sm:$0xff]
    %v478 = vld [vmem:[%s2 + $0x28] sm:$0xff]
    %v479 = vld [vmem:[%s2 + $0x30] sm:$0xff]
    %v480 = vld [vmem:[%s2 + $0x38] sm:$0xff]
    %v481 = vlaneseq
    %v482 = vshrl.u32 %v481, 7
    %v483 = vsub.s32 0, %v482
    %v484 = vrot.slane %v25, %v483
    %v487 = vsel %vm290, %v472, %v465
    %v488 = vsel %vm402, %v487, 0
    %490 = vmatprep.subr.mxu0 0.0
    %491 = vmatpush1.msra.mxu0 %v473
    %492 = vmatprep.subr.mxu0 0.0
    %493 = vmatpush1.msra.mxu0 %v474
    %494 = vmatprep.subr.mxu0 0.0
    %495 = vmatpush1.msra.mxu0 %v475
    %496 = vmatprep.subr.mxu0 0.0
    %497 = vmatpush1.msra.mxu0 %v476
    %498 = vmatprep.subr.mxu0 0.0
    %499 = vmatpush1.msra.mxu0 %v477
    %500 = vmatprep.subr.mxu0 0.0
    %501 = vmatpush1.msra.mxu0 %v478
    %502 = vmatprep.subr.mxu0 0.0
    %503 = vmatpush1.msra.mxu0 %v479
    %504 = vmatprep.subr.mxu0 0.0
    %505 = vmatpush1.msra.mxu0 %v480
    %506 = vmatprep.subr.mxu0 0.0
    %507 = vmatpush1.msra.mxu0 0.0
    %508 = vmatprep.subr.mxu0 0.0
    %509 = vmatpush1.msra.mxu0 0.0
    %510 = vmatprep.subr.mxu0 0.0
    %511 = vmatpush1.msra.mxu0 0.0
    %512 = vmatprep.subr.mxu0 0.0
    %513 = vmatpush1.msra.mxu0 0.0
    %514 = vmatprep.subr.mxu0 0.0
    %515 = vmatpush1.msra.mxu0 0.0
    %516 = vmatprep.subr.mxu0 0.0
    %517 = vmatpush1.msra.mxu0 0.0
    %518 = vmatprep.subr.mxu0 0.0
    %519 = vmatpush1.msra.mxu0 0.0
    %520 = vmatprep.subr.mxu0 0.0
    %521 = vmatpush1.msra.mxu0 0.0
    %522 = vmatprep.subr.mxu0 0.0
    %523 = vmatpush1.msra.mxu0 0.0
    %524 = vmatprep.subr.mxu0 0.0
    %525 = vmatpush1.msra.mxu0 0.0
    %526 = vmatprep.subr.mxu0 0.0
    %527 = vmatpush1.msra.mxu0 0.0
    %528 = vmatprep.subr.mxu0 0.0
    %529 = vmatpush1.msra.mxu0 0.0
    %530 = vmatprep.subr.mxu0 0.0
    %531 = vmatpush1.msra.mxu0 0.0
    %532 = vmatprep.subr.mxu0 0.0
    %533 = vmatpush1.msra.mxu0 0.0
    %534 = vmatprep.subr.mxu0 0.0
    %535 = vmatpush1.msra.mxu0 0.0
    %536 = vmatprep.subr.mxu0 0.0
    %537 = vmatpush1.msra.mxu0 0.0
    %538 = vmatprep.subr.mxu0 0.0
    %539 = vmatpush1.msra.mxu0 0.0
    %540 = vmatprep.subr.mxu0 0.0
    %541 = vmatpush1.msra.mxu0 0.0
    %542 = vmatprep.subr.mxu0 0.0
    %543 = vmatpush1.msra.mxu0 0.0
    %544 = vmatprep.subr.mxu0 0.0
    %545 = vmatpush1.msra.mxu0 0.0
    %546 = vmatprep.subr.mxu0 0.0
    %547 = vmatpush1.msra.mxu0 0.0
    %548 = vmatprep.subr.mxu0 0.0
    %549 = vmatpush1.msra.mxu0 0.0
    %550 = vmatprep.subr.mxu0 0.0
    %551 = vmatpush1.msra.mxu0 0.0
    %552 = vmatprep.subr.mxu0 0.0
    %553 = vmatpush1.msra.mxu0 0.0
    %554 = vmatprep.mubr.f32.mxu0 0.0
    %555 = vmatmul.mubr.f32.gmra.mrb[0].mxu0 %v488
    %v556 = vpop.f32.mrb[0].mxu0
    %v557 = vadd.f32 %v484, %v556
    %v558 = vpop.f32.mrb[0].mxu0
    %559 = vdwg.mxu0
    %v560 = vxor.u32 %v557, 2147483648
    %v561 = vmul.f32 %v560, 1.442695
    %v562 = vpow.pop %v561
    %v563 = vadd.f32 %v562, 1.0
    %v564 = vrcp.pop %v563
    %v565 = vmul.f32 1.0, %v564
    %566 = vst [vmem:[#allocation4] sm:$0x3] %v565
    // Predicated region
    $region14: #{naggn_forward.1} parent=1 // pred_check
      _
    $region15: #{naggn_forward.1} parent=1 // pred_check_branch
      %568 = sbr.rel (0) target = $region17
    $region16: #{naggn_forward.1} parent=1 // pred_region
      %s570 = ssub.s32 32, 32
      %571 = vsyncadd [#allocation5], %s570
      %s573 = sshll.u32 [#allocation4], 4
      %s574 = int_to_ptr.vmem [resolvable:$true] %s573
      %576 = dma.vmem_to_hbm [thread:$0]  %s574, 32, %s4, [#allocation5]
    $region17: #{naggn_forward.1} parent=1 // pred_fallthru
      _
    // Predicated region
    $region18: #{naggn_forward.1} parent=1 // pred_check
      _
    $region19: #{naggn_forward.1} parent=1 // pred_check_branch
      %578 = sbr.rel (0) target = $region21
    $region20: #{naggn_forward.1} parent=1 // pred_region
      %579 = dma.done [#allocation5], 32
    $region21: #{naggn_forward.1} parent=1 // pred_fallthru
      _
    %580 = vsyncpa [#allocation5], 1

</llo_original>
